<compile_context>
chip_gen: v5e
topology: v5e:2x2
jax: 0.10.0
libtpu: 0.0.40
codegen_flags: <defaults>
</compile_context>

<pallas_src>
import math

import jax
import jax.numpy as jnp
from jax.experimental import pallas as pl
from jax.experimental.pallas import tpu as pltpu

_LANE = 128                      # last block dim: full lane width -> unmasked vst
_MAX_TILE_BYTES = 8 << 20        # 8 MiB/tile; 4x live = 32 MiB (fits all gens)
_MIN_PALLAS_BYTES = 4 * 1024     # below this just do the multiply in XLA


def _drop_path_kernel(x_ref, s_ref, o_ref):
    # x_ref / o_ref: (tile_rows, 128) VMEM tiles of the fused (rows, 128) slab.
    # s_ref: (tile_rows, 1) per-row scale in the activation dtype
    #        (0.0 -> path dropped, 1/keep_prob -> path kept, rescaled).
    o_ref[...] = (x_ref[...] * s_ref[...]).astype(o_ref.dtype)


def _vmem_limit_bytes():
    """Generation-aware scoped-VMEM budget (<= 64 MiB, <= 3/4 of physical)."""
    cap = 64 * 1024 * 1024
    try:
        info = pltpu.get_tpu_info()
        cap = int(getattr(info, "vmem_capacity_bytes", cap))
    except Exception:
        pass
    return min((cap * 3) // 4, 64 * 1024 * 1024)


def _sublane_multiple(dtype):
    # Native sublane packing: 8 rows/vreg for 32-bit, 16 for 16-bit, 32 for 8-bit.
    return max(8, 32 // jnp.dtype(dtype).itemsize)


def drop_path_pallas(x, drop_prob: float = 0.0, training: bool = False,
                     *, key=None):
    """Pallas implementation of drop_path (stochastic depth), forward only.

    x: (N, ...) array (any float dtype).  Returns same shape / dtype.
    """
    if drop_prob == 0.0 or not training:
        return x

    keep_prob = 1.0 - float(drop_prob)
    if keep_prob <= 0.0:
        # drop_prob == 1: every path dropped (avoid the 0/0 NaN of the naive form).
        return jnp.zeros_like(x)

    # TODO(synk): key=None falls back to a fixed PRNGKey(0); pass a fresh key
    # per step for real stochastic-depth training behaviour.
    if key is None:
        key = jax.random.PRNGKey(0)

    orig_shape = x.shape
    N = orig_shape[0]
    M = int(math.prod(orig_shape[1:]))

    # Per-sample Bernoulli(keep_prob) mask, same recipe as the PyTorch code:
    # floor(keep_prob + U[0,1)) in {0,1}.  Computed in plain JAX (glue).
    rand = jax.random.uniform(key, (N,), dtype=jnp.float32)
    mask = jnp.floor(keep_prob + rand)                      # 0.0 or 1.0
    scale = mask / keep_prob                                # 0 or 1/keep_prob

    itemsize = jnp.dtype(x.dtype).itemsize
    total_bytes = x.size * itemsize

    # Ragged (M % 128 != 0) samples would need a pad + trailing slice, i.e. two
    # extra full HBM passes on a bandwidth-bound op; tiny inputs are dominated
    # by fixed call overhead.  Both go to plain XLA instead.
    if M % _LANE != 0 or total_bytes < _MIN_PALLAS_BYTES:
        bshape = (N,) + (1,) * (x.ndim - 1)
        return x * scale.reshape(bshape).astype(x.dtype)

    # Fuse all samples into one lane-dense (total_rows, 128) slab with a
    # matching per-row scale column (in the activation's native dtype).
    rows_per_sample = M // _LANE
    total_rows = N * rows_per_sample
    x2 = x.reshape(total_rows, _LANE)
    scale_rows = jnp.repeat(scale.astype(x.dtype),
                            rows_per_sample).reshape(total_rows, 1)

    # Tile sizing: biggest sublane-aligned tile <= min(budget/4, 8 MiB); force
    # >=2 grid steps when possible so v7x's two TensorCores both get work.
    sub = _sublane_multiple(x.dtype)
    vmem_limit = _vmem_limit_bytes()
    tile_bytes = min(vmem_limit // 4, _MAX_TILE_BYTES)
    r_cap = max(sub, (tile_bytes // (_LANE * itemsize)) // sub * sub)

    if total_rows > r_cap:
        tile_rows = r_cap
    else:
        half = -(-((total_rows + 1) // 2) // sub) * sub     # ceil(rows/2) -> sublane mult
        tile_rows = half if (sub <= half < total_rows) else total_rows

    grid = (pl.cdiv(total_rows, tile_rows),)

    block_x = pl.BlockSpec((tile_rows, _LANE), lambda r: (r, 0))
    block_s = pl.BlockSpec((tile_rows, 1), lambda r: (r, 0))

    # TODO(synk): optionally skip the input DMA entirely for dropped samples
    # (memory_space=pl.ANY + manual copies gated on scale != 0) to save
    # ~drop_prob/2 of HBM traffic; not worth the hand-rolled pipeline here.
    out = pl.pallas_call(
        _drop_path_kernel,
        out_shape=jax.ShapeDtypeStruct((total_rows, _LANE), x.dtype),
        grid=grid,
        in_specs=[block_x, block_s],
        out_specs=block_x,
        compiler_params=pltpu.CompilerParams(
            dimension_semantics=("parallel",),
            vmem_limit_bytes=vmem_limit,
        ),
        cost_estimate=pl.CostEstimate(
            flops=total_rows * _LANE,
            transcendentals=0,
            bytes_accessed=2 * total_rows * _LANE * itemsize
            + total_rows * itemsize,
        ),
    )(x2, scale_rows)

    return out.reshape(orig_shape)


class DropPath:
    """Mirror of the PyTorch DropPath module (forward only)."""

    def __init__(self, drop_prob=None):
        self.drop_prob = drop_prob
        self.training = True  # PyTorch modules default to training mode

    def __call__(self, x, key=None):
        p = 0.0 if self.drop_prob is None else float(self.drop_prob)
        return drop_path_pallas(x, p, self.training, key=key)


if __name__ == "__main__":
    key = jax.random.PRNGKey(0)
    k_x, k_mask = jax.random.split(key)

    drop_prob = 0.3
    keep_prob = 1.0 - drop_prob

    module = DropPath(drop_prob=drop_prob)
    module.training = True

    # --- f32 NCHW input: batch=2, channels=4, spatial=16x16 (Pallas path) ---
    x = jax.random.normal(k_x, (2, 4, 16, 16), dtype=jnp.float32)
    y = jax.block_until_ready(module(x, key=k_mask))

    rand = jax.random.uniform(k_mask, (2,), dtype=jnp.float32)
    mask = jnp.floor(keep_prob + rand).reshape(2, 1, 1, 1)
    y_ref = x / keep_prob * mask
    assert y.shape == x.shape and y.dtype == x.dtype
    assert jnp.allclose(y, y_ref, atol=1e-6), "f32 mismatch vs reference"

    # --- bf16 path: multiply happens in native dtype, result stays bf16 ---
    x_bf16 = x.astype(jnp.bfloat16)
    y_bf16 = jax.block_until_ready(module(x_bf16, key=k_mask))
    assert y_bf16.dtype == jnp.bfloat16
    assert jnp.allclose(y_bf16.astype(jnp.float32),
                        x_bf16.astype(jnp.float32) / keep_prob * mask,
                        atol=1e-2, rtol=1e-2), "bf16 mismatch vs reference"

    # --- larger fused-rows case (multi-tile grid) ---
    x_big = jax.random.normal(k_x, (4, 32, 32, 32), dtype=jnp.float32)
    k_mask4 = jax.random.PRNGKey(7)
    y_big = jax.block_until_ready(module(x_big, key=k_mask4))
    rand4 = jax.random.uniform(k_mask4, (4,), dtype=jnp.float32)
    mask4 = jnp.floor(keep_prob + rand4).reshape(4, 1, 1, 1)
    assert jnp.allclose(y_big, x_big / keep_prob * mask4,
                        atol=1e-6), "large-input mismatch vs reference"

    # --- non-128-divisible sample size: XLA fallback path ---
    x_odd = jax.random.normal(k_x, (2, 3, 5, 5), dtype=jnp.float32)
    y_odd = jax.block_until_ready(module(x_odd, key=k_mask))
    assert jnp.allclose(y_odd, x_odd / keep_prob * mask,
                        atol=1e-6), "ragged fallback mismatch"

    # --- drop_prob = 1.0: guarded, returns zeros (no NaNs) ---
    module_all = DropPath(drop_prob=1.0)
    y_all = jax.block_until_ready(module_all(x, key=k_mask))
    assert jnp.array_equal(y_all, jnp.zeros_like(x))

    # --- eval mode / drop_prob=0: identity ---
    module.training = False
    y_eval = jax.block_until_ready(module(x, key=k_mask))
    assert jnp.array_equal(y_eval, x)

    print("KERNEL_OK")
</pallas_src>

<mosaic_0001>
module attributes {stable_mosaic.version = 11 : i64} {
  func.func @_drop_path_kernel(%arg0: i32, %arg1: memref<8x128xf32, #tpu.memory_space<vmem>>, %arg2: memref<8x1xf32, #tpu.memory_space<vmem>>, %arg3: memref<8x128xf32, #tpu.memory_space<vmem>>) attributes {dimension_semantics = [#tpu.dimension_semantics<parallel>], iteration_bounds = array<i64: 2>, scalar_prefetch = 0 : i64, scratch_operands = 0 : i64, tpu.core_type = #tpu.core_type<tc>, window_params = [{transform_indices = @transform_0, window_bounds = array<i64: 8, 128>}, {transform_indices = @transform_1, window_bounds = array<i64: 8, 1>}, {transform_indices = @transform_2, window_bounds = array<i64: 8, 128>}]} {
    %c0 = arith.constant 0 : index
    %c0_0 = arith.constant 0 : index
    %0 = vector.load %arg1[%c0, %c0_0] : memref<8x128xf32, #tpu.memory_space<vmem>>, vector<8x128xf32>
    %c0_1 = arith.constant 0 : index
    %c0_2 = arith.constant 0 : index
    %1 = vector.load %arg2[%c0_1, %c0_2] : memref<8x1xf32, #tpu.memory_space<vmem>>, vector<8x1xf32>
    %2 = vector.broadcast %1 : vector<8x1xf32> to vector<8x128xf32>
    %3 = arith.mulf %0, %2 : vector<8x128xf32>
    %c0_3 = arith.constant 0 : index
    %c0_4 = arith.constant 0 : index
    %4 = vector.load %arg3[%c0_3, %c0_4] : memref<8x128xf32, #tpu.memory_space<vmem>>, vector<8x128xf32>
    tpu.vector_store %arg3[%c0_3, %c0_4], %3 {strides = array<i32>} : memref<8x128xf32, #tpu.memory_space<vmem>>, vector<8x128xf32>,
    return
  }
  func.func @transform_0(%arg0: i32) -> (i32, i32) {
    %c0_i32 = arith.constant 0 : i32
    %c0_i32_0 = arith.constant 0 : i32
    return %arg0, %c0_i32 : i32, i32
  }
  func.func @transform_1(%arg0: i32) -> (i32, i32) {
    %c0_i32 = arith.constant 0 : i32
    %c0_i32_0 = arith.constant 0 : i32
    return %arg0, %c0_i32 : i32, i32
  }
  func.func @transform_2(%arg0: i32) -> (i32, i32) {
    %c0_i32 = arith.constant 0 : i32
    %c0_i32_0 = arith.constant 0 : i32
    return %arg0, %c0_i32 : i32, i32
  }
}

</mosaic_0001>

<llo_original>
// kernel: tpu_custom_call.1
$region0: #{tpu_custom_call.1}
  #allocation0 [shape = 'u32[]', space=smem, size = 0x4, offset = 0x4, fixed_abs, tag = 'smem constant byte address 0x4 - core index']
  #allocation1 [shape = 'u32[72,128]{1,0:T(1,128)}', space=vmem, size = 0x9000, scoped, tag = 'internal scratch']
  %s0 = inlined_call_operand.vmem [shape: f32[16,128], index: 0, kind: input, shape index: {}]
  %s1 = inlined_call_operand.vmem [shape: f32[16,1], index: 1, kind: input, shape index: {}]
  %s2 = inlined_call_operand.hbm [shape: f32[16,128], index: 2, kind: output, shape index: {}]
  %s3 = sld [smem:[#allocation0]]
  $region41: #{tpu_custom_call.1} parent=0
    _
  %s5 = ssub.s32 1, %s3
  %s6 = scalar_select 0, %s5, %s3
  $region1: #{tpu_custom_call.1} parent=0
    #allocation2 [shape = 'u8[8192]{0}', space=vmem, size = 0x2000, scoped, tag = 'output window, operand 0']
    #allocation3 [shape = 's32[2]{0}', space=sflag, size = 0x8, scoped, tag = 'scoped memory for tpu_custom_call.1']
    %7 = vsyncpa [#allocation3], 0
    %s8 = scalar_lea.sflag [#allocation3], 1
    %9 = vsyncpa %s8, 0
    loop: start=0, step=1, limit=4
    $region2: #{tpu_custom_call.1} parent=1 // loop_pre_header
      _
    $region3: #{tpu_custom_call.1} parent=1 // loop_header
      %s11 = sphi 0, %s15
      %p12 = scmp.ge.s32.totalorder %s11, 4
      %s21 = sphi 0, %s23
      %s24 = sphi 0, %s21
      %s25 = sphi 0, %s24
      %s41 = sphi 0, %s25
      %s47 = sphi 0, %s49
      %s50 = sphi 0, %s47
      %s51 = sphi 0, %s50
      %s67 = sphi 0, %s51
      %s73 = sphi 0, %s75
      %s76 = sphi 0, %s73
      %s77 = sphi 0, %s76
      %s93 = sphi 0, %s77
    $region4: #{tpu_custom_call.1} parent=1 // loop_header_branch
      %14 = sbr.rel (%p12) target = $region8
    $region5: #{tpu_custom_call.1} parent=1 // loop_body
      %s16 = ssub.s32 %s11, 1
      %s17 = ssub.s32 %s11, 2
      %s18 = sadd.s32 %s11, 1
      %s19 = ssub.s32 %s11, %s18
      %p20 = scmp.eq.s32.totalorder %s19, 0
      %s22 = sadd.s32 %s21, 1
      %s23 = scalar_select %p20, %s21, %s22
      %p26 = pneg %p20
      %p27 = scmp.eq.s32.totalorder %s11, 1
      %p28 = por %p26, %p27
      %p29 = scmp.ne.s32.totalorder %s21, %s24
      %p30 = scmp.eq.s32.totalorder %s11, 0
      %p31 = por %p29, %p30
      %p32 = scmp.ne.s32.totalorder %s21, %s24
      %p33 = scmp.eq.s32.totalorder %s16, 1
      %p34 = por %p32, %p33
      %p35 = scmp.ne.s32.totalorder %s24, %s25
      %p36 = scmp.eq.s32.totalorder %s16, 0
      %p37 = por %p35, %p36
      %p38 = scmp.ne.s32.totalorder %s24, %s25
      %p39 = scmp.eq.s32.totalorder %s17, 1
      %p40 = por %p38, %p39
      %p42 = scmp.ne.s32.totalorder %s25, %s41
      %p43 = scmp.eq.s32.totalorder %s17, 0
      %p44 = por %p42, %p43
      %s45 = ssub.s32 %s11, %s18
      %p46 = scmp.eq.s32.totalorder %s45, 0
      %s48 = sadd.s32 %s47, 1
      %s49 = scalar_select %p46, %s47, %s48
      %p52 = pneg %p46
      %p53 = scmp.eq.s32.totalorder %s11, 1
      %p54 = por %p52, %p53
      %p55 = scmp.ne.s32.totalorder %s47, %s50
      %p56 = scmp.eq.s32.totalorder %s11, 0
      %p57 = por %p55, %p56
      %p58 = scmp.ne.s32.totalorder %s47, %s50
      %p59 = scmp.eq.s32.totalorder %s16, 1
      %p60 = por %p58, %p59
      %p61 = scmp.ne.s32.totalorder %s50, %s51
      %p62 = scmp.eq.s32.totalorder %s16, 0
      %p63 = por %p61, %p62
      %p64 = scmp.ne.s32.totalorder %s50, %s51
      %p65 = scmp.eq.s32.totalorder %s17, 1
      %p66 = por %p64, %p65
      %p68 = scmp.ne.s32.totalorder %s51, %s67
      %p69 = scmp.eq.s32.totalorder %s17, 0
      %p70 = por %p68, %p69
      %s71 = ssub.s32 %s11, %s18
      %p72 = scmp.eq.s32.totalorder %s71, 0
      %s74 = sadd.s32 %s73, 1
      %s75 = scalar_select %p72, %s73, %s74
      %p78 = pneg %p72
      %p79 = scmp.eq.s32.totalorder %s11, 1
      %p80 = por %p78, %p79
      %p81 = scmp.ne.s32.totalorder %s73, %s76
      %p82 = scmp.eq.s32.totalorder %s11, 0
      %p83 = por %p81, %p82
      %p84 = scmp.ne.s32.totalorder %s73, %s76
      %p85 = scmp.eq.s32.totalorder %s16, 1
      %p86 = por %p84, %p85
      %p87 = scmp.ne.s32.totalorder %s76, %s77
      %p88 = scmp.eq.s32.totalorder %s16, 0
      %p89 = por %p87, %p88
      %p90 = scmp.ne.s32.totalorder %s76, %s77
      %p91 = scmp.eq.s32.totalorder %s17, 1
      %p92 = por %p90, %p91
      %p94 = scmp.ne.s32.totalorder %s77, %s93
      %p95 = scmp.eq.s32.totalorder %s17, 0
      %p96 = por %p94, %p95
      %p97 = scmp.le.s32.totalorder 1, %s11
      %p98 = scmp.lt.s32.totalorder %s11, 3
      %p99 = pnand %p97, %p98
      %p100 = pneg %p99
      // Predicated region
      $region9: #{tpu_custom_call.1} parent=5 // pred_check
        _
      $region10: #{tpu_custom_call.1} parent=5 // pred_check_branch
        %102 = sbr.rel (%p99) target = $region12
      $region11: #{tpu_custom_call.1} parent=5 // pred_region
        %s103 = ssub.s32 %s11, 1
      $region12: #{tpu_custom_call.1} parent=5 // pred_fallthru
        _
      %p104 = scmp.lt.s32.totalorder %s11, 2
      // Predicated region
      $region13: #{tpu_custom_call.1} parent=5 // pred_check
        %p105 = pneg %p104
      $region14: #{tpu_custom_call.1} parent=5 // pred_check_branch
        %107 = sbr.rel (%p105) target = $region16
      $region15: #{tpu_custom_call.1} parent=5 // pred_region
        // Predicated region
        $region17: #{tpu_custom_call.1} parent=15 // pred_check
          %p108 = pneg %p31
        $region18: #{tpu_custom_call.1} parent=15 // pred_check_branch
          %110 = sbr.rel (%p108) target = $region20
        $region19: #{tpu_custom_call.1} parent=15 // pred_region
          %p111 = scmp.lt.s32.totalorder %s11, 1
          %s112 = scalar_select %p111, %s11, 1
          %s113 = smul.addr %s112, 8
          %s114 = scalar_lea.vmem %s0, %s113
        $region20: #{tpu_custom_call.1} parent=15 // pred_fallthru
          _
        // Predicated region
        $region21: #{tpu_custom_call.1} parent=15 // pred_check
          %p115 = pneg %p57
        $region22: #{tpu_custom_call.1} parent=15 // pred_check_branch
          %117 = sbr.rel (%p115) target = $region24
        $region23: #{tpu_custom_call.1} parent=15 // pred_region
          %p118 = scmp.lt.s32.totalorder %s11, 1
          %s119 = scalar_select %p118, %s11, 1
          %s120 = smul.addr %s119, 8
          %s121 = scalar_lea.vmem %s1, %s120
        $region24: #{tpu_custom_call.1} parent=15 // pred_fallthru
          _
      $region16: #{tpu_custom_call.1} parent=5 // pred_fallthru
        _
      %p122 = scmp.le.s32.totalorder 1, %s11
      %p123 = scmp.lt.s32.totalorder %s11, 3
      %p124 = pnand %p122, %p123
      %p125 = pneg %p124
      // Predicated region
      $region25: #{tpu_custom_call.1} parent=5 // pred_check
        _
      $region26: #{tpu_custom_call.1} parent=5 // pred_check_branch
        %127 = sbr.rel (%p124) target = $region28
      $region27: #{tpu_custom_call.1} parent=5 // pred_region
        %s128 = ssub.s32 %s11, 1
        %p129 = scmp.lt.s32.totalorder %s16, 1
        %s130 = scalar_select %p129, %s16, 1
        %s131 = smul.addr %s130, 8
        %s132 = scalar_lea.vmem %s0, %s131
        %p133 = pneg %p37
        %p134 = pneg %p34
        %p135 = scmp.lt.s32.totalorder %s16, 1
        %s136 = scalar_select %p135, %s16, 1
        %s137 = smul.addr %s136, 8
        %s138 = scalar_lea.vmem %s1, %s137
        %p139 = pneg %p63
        %p140 = pneg %p60
        %p141 = pneg %p89
        %p142 = pneg %p86
        %s143 = sand.u32 %s76, 1
        %s144 = scalar_lea.sflag [#allocation3], %s143
        %s145 = sand.u32 %s76, 1
        %s146 = smul.addr %s145, 8
        %s147 = scalar_lea.vmem [#allocation2], %s146
        %p148 = scmp.lt.s32.totalorder %s16, 1
        %s149 = scalar_select %p148, %s16, 1
        %s150 = smul.addr %s149, 8
        %s151 = scalar_lea.vmem %s0, %s150
        %p152 = scmp.lt.s32.totalorder %s16, 1
        %s153 = scalar_select %p152, %s16, 1
        %s154 = smul.addr %s153, 8
        %s155 = scalar_lea.vmem %s1, %s154
        %v156 = vld [vmem:[%s151] sm:$0xff]
        %v157 = vld [vmem:[%s155] sm:$0xff]
        %159 = vset.pattern.permute.xlu0 0
        %160 = vperm.xlu0 %159, %v157
        %v161 = vpop.permute.xlu0 %160
        %v163 = vmul.f32 %v156, %v161
        %164 = vst [vmem:[%s147] sm:$0xff] %v163
        %s165 = sand.u32 %s76, 1
        %s166 = scalar_lea.sflag [#allocation3], %s165
        %s167 = sand.u32 %s76, 1
        %s168 = smul.addr %s167, 8
        %s169 = scalar_lea.vmem [#allocation2], %s168
        // Predicated region
        $region29: #{tpu_custom_call.1} parent=27 // pred_check
          %p170 = pneg %p86
        $region30: #{tpu_custom_call.1} parent=27 // pred_check_branch
          %172 = sbr.rel (%p170) target = $region32
        $region31: #{tpu_custom_call.1} parent=27 // pred_region
          %174 = vsyncadd %s166, 0
          %s175 = smul.addr %s16, 8
          %s176 = scalar_lea.hbm %s2, %s175
          %s178 = sshll.u32 %s169, 4
          %s179 = int_to_ptr.vmem [resolvable:$true] %s178
          %s180 = sshll.u32 %s176, 4
          %s181 = int_to_ptr.hbm [resolvable:$true] %s180
          %183 = dma.vmem_to_hbm [thread:$0]  %s179, 128, %s181, %s166
        $region32: #{tpu_custom_call.1} parent=27 // pred_fallthru
          _
      $region28: #{tpu_custom_call.1} parent=5 // pred_fallthru
        _
      %p184 = scmp.le.s32.totalorder 2, %s11
      // Predicated region
      $region33: #{tpu_custom_call.1} parent=5 // pred_check
        %p185 = pneg %p184
      $region34: #{tpu_custom_call.1} parent=5 // pred_check_branch
        %187 = sbr.rel (%p185) target = $region36
      $region35: #{tpu_custom_call.1} parent=5 // pred_region
        %s188 = ssub.s32 %s11, 2
        // Predicated region
        $region37: #{tpu_custom_call.1} parent=35 // pred_check
          %p189 = pneg %p92
        $region38: #{tpu_custom_call.1} parent=35 // pred_check_branch
          %191 = sbr.rel (%p189) target = $region40
        $region39: #{tpu_custom_call.1} parent=35 // pred_region
          %s192 = sand.u32 %s77, 1
          %s193 = scalar_lea.sflag [#allocation3], %s192
          %s194 = sand.u32 %s77, 1
          %s195 = smul.addr %s194, 8
          %s196 = scalar_lea.vmem [#allocation2], %s195
          %198 = dma.done %s193, 128
        $region40: #{tpu_custom_call.1} parent=35 // pred_fallthru
          _
      $region36: #{tpu_custom_call.1} parent=5 // pred_fallthru
        _
    $region6: #{tpu_custom_call.1} parent=1 // loop_footer
      %s15 = sadd.s32 1, %s11
    $region7: #{tpu_custom_call.1} parent=1 // loop_footer_branch
      %10 = sbr.rel target = $region3
    $region8: #{tpu_custom_call.1} parent=1 // loop_exit
      _
    %199 = vsyncpa [#allocation3], 1
    %s200 = scalar_lea.sflag [#allocation3], 1
    %201 = vsyncpa %s200, 1

</llo_original>
